<compile_context>
chip_gen: v5e
topology: v5e:2x2
jax: 0.10.0
libtpu: 0.0.40
codegen_flags: <defaults>
</compile_context>

<pallas_src>
import numpy as np

import jax
import jax.numpy as jnp
from jax import lax
from jax.experimental import pallas as pl
from jax.experimental.pallas import tpu as pltpu


# ----------------------------------------------------------------------------
# Single fused Pallas kernel (both modalities + fusion + classifier + softmax)
# ----------------------------------------------------------------------------
def fused_net_kernel(x0_ref, x1_ref,
                     m0_ref, m1_ref, b20_ref, b21_ref,
                     q0_ref, q1_ref, b30_ref, b31_ref,
                     c0_ref, c1_ref, bcls_ref, out_ref):
    def elu(v):
        return jnp.where(v > 0, v, jnp.exp(jnp.minimum(v, 0.0)) - 1.0)

    def affine_elu(act_f32, w_ref, b_ref):
        # bf16 only at the MXU boundary; f32 accumulation; f32 VPU/EUP math.
        y = jnp.dot(act_f32.astype(jnp.bfloat16), w_ref[...],
                    preferred_element_type=jnp.float32) + b_ref[...]
        return elu(y)

    # Stage A (per modality): conv1 + BN1 + grouped conv2 + BN2 (folded) + ELU
    z0 = affine_elu(x0_ref[...], m0_ref, b20_ref)
    z1 = affine_elu(x1_ref[...], m1_ref, b21_ref)
    # Stage B (per modality): avgpool(1,4) + depthwise conv3 + 1x1 conv4 + BN3 + ELU
    g0 = affine_elu(z0, q0_ref, b30_ref)
    g1 = affine_elu(z1, q1_ref, b31_ref)
    # Stage C: avgpool(1,8) + flatten + concat fusion + Linear (folded) + softmax
    logits = (jnp.dot(g0.astype(jnp.bfloat16), c0_ref[...],
                      preferred_element_type=jnp.float32)
              + jnp.dot(g1.astype(jnp.bfloat16), c1_ref[...],
                        preferred_element_type=jnp.float32)
              + bcls_ref[...])
    mx = jnp.max(logits, axis=1, keepdims=True)
    e = jnp.exp(logits - mx)
    out_ref[...] = e * pl.reciprocal(jnp.sum(e, axis=1, keepdims=True), approx=True)


def fused_net_forward(x0_flat, x1_flat, params, *, batch_tile=256):
    """x0_flat: (B, H0*T), x1_flat: (B, H1*T) float32 -> softmax probs (B, n_classes)."""
    B = x0_flat.shape[0]
    C = params["bcls"].shape[1]
    weights = (params["M0"], params["M1"], params["b2_0"], params["b2_1"],
               params["Q0"], params["Q1"], params["b3_0"], params["b3_1"],
               params["Cls0"], params["Cls1"], params["bcls"])
    args = (x0_flat, x1_flat) + weights
    out_shape = jax.ShapeDtypeStruct((B, C), jnp.float32)

    if B <= batch_tile:
        # Tiny-batch / latency path: no grid, no BlockSpecs — everything lands in
        # VMEM once, one kernel invocation, no grid-loop scaffolding.
        return pl.pallas_call(fused_net_kernel, out_shape=out_shape)(*args)

    # Streaming-batch path: batch tiles stream through VMEM-resident weights.
    assert B % batch_tile == 0, "pad batch to a multiple of batch_tile"
    grid = (B // batch_tile,)
    xb_spec = lambda a: pl.BlockSpec((batch_tile, a.shape[1]), lambda i: (i, 0))
    w_spec = lambda a: pl.BlockSpec(a.shape, lambda i: (0, 0))   # DMA'd once, stays resident
    in_specs = [xb_spec(x0_flat), xb_spec(x1_flat)] + [w_spec(w) for w in weights]
    out_specs = pl.BlockSpec((batch_tile, C), lambda i: (i, 0))
    return pl.pallas_call(
        fused_net_kernel,
        out_shape=out_shape,
        grid=grid,
        in_specs=in_specs,
        out_specs=out_specs,
        compiler_params=pltpu.CompilerParams(dimension_semantics=("parallel",)),
    )(*args)


# ----------------------------------------------------------------------------
# Host-side (trace-time) folding of the EEGNet4 layers into dense matrices.
# All done in float64 numpy for exactness; zero runtime cost.
# ----------------------------------------------------------------------------
def _np_band(w, in_len, pad):
    """Band/Toeplitz matrix of a 1-D conv.  w: (C, K).  Returns (C, in_len, out_len):
       y[c, o] = sum_t x[t] * band[c, t, o]  ==  padded conv with `pad` zeros each side."""
    C, K = w.shape
    out_len = in_len + 2 * pad - K + 1
    t = np.arange(in_len)[:, None]
    o = np.arange(out_len)[None, :]
    k = t - o + pad
    valid = (k >= 0) & (k < K)
    kc = np.clip(k, 0, K - 1)
    return w[:, kc] * valid[None, :, :].astype(np.float64)


def _np_pool(width, window):
    """AvgPool matrix (width, width//window) with remainder columns dropped."""
    wout = width // window
    m = np.zeros((width, wout), np.float64)
    for j in range(wout):
        m[j * window:(j + 1) * window, j] = 1.0 / window
    return m


def build_modality_matrices(p, H, T, wcls_mod):
    """Fold one EEGNet4 (eval mode) + its slice of the classifier weight.

    Returns:
      M    (H*T, 8*W1)   : conv1 + BN1 + grouped conv2 + BN2 (pre-ELU affine)
      b2   (8*W1,)
      Q    (8*W1, 8*W3)  : avgpool4 + depthwise conv3 + 1x1 conv4 + BN3 (pre-ELU affine)
      b3   (8*W3,)
      Cls  (8*W3, n_cls) : avgpool8 + flatten + classifier-weight slice
    """
    f = lambda a: np.asarray(a, np.float64)
    w1 = f(p["w1"]); s1 = f(p["bn1_s"]); sh1 = f(p["bn1_b"])
    w2 = f(p["w2"]); b2 = f(p["b2"]);    s2 = f(p["bn2_s"]); sh2 = f(p["bn2_b"])
    w3 = f(p["w3"]); b3 = f(p["b3"])
    w4 = f(p["w4"]); b4 = f(p["b4"]);    s3 = f(p["bn3_s"]); sh3 = f(p["bn3_b"])

    C2 = 8
    grp = np.arange(C2) // 2                       # grouped conv2: out o uses in chan o//2

    # ---- Stage A fold ----
    K1 = w1.shape[1]; P1 = K1 // 2
    W1 = T + 2 * P1 - K1 + 1
    A1 = _np_band(w1, T, P1)                       # (4, T, W1)
    A1g = A1[grp]                                  # (8, T, W1)
    w2s = w2 * (s2 * s1[grp])[:, None]             # (8, H)
    M = np.einsum('oh,otw->htow', w2s, A1g).reshape(H * T, C2 * W1)
    b2f = s2 * (sh1[grp] * w2.sum(axis=1) + b2) + sh2          # (8,)
    b2f = np.repeat(b2f, W1)                                   # (8*W1,)

    # ---- Stage B fold ----
    K3 = w3.shape[1]; P3 = K3
    Wp1 = W1 // 4
    W3 = Wp1 + 2 * P3 - K3 + 1
    pool1 = _np_pool(W1, 4)                        # (W1, Wp1)
    B3 = _np_band(w3, Wp1, P3)                     # (8, Wp1, W3)
    CB = np.einsum('wp,cpz->cwz', pool1, B3)       # (8, W1, W3)
    w4s = w4 * s3[:, None]                         # (8, 8)
    Q = np.einsum('oc,cwz->cwoz', w4s, CB).reshape(C2 * W1, C2 * W3)
    b3f = s3 * (w4 @ b3 + b4) + sh3                # (8,)
    b3f = np.repeat(b3f, W3)                       # (8*W3,)

    # ---- Stage C fold (pool + flatten + classifier slice) ----
    Wp2 = W3 // 8
    pool2 = _np_pool(W3, 8)                        # (W3, Wp2)
    Wm = np.asarray(wcls_mod, np.float64).reshape(-1, C2, Wp2)   # (n_cls, 8, Wp2)
    Cls = np.einsum('wp,nop->own', pool2, Wm).reshape(C2 * W3, -1)
    return M, b2f, Q, b3f, Cls


# ----------------------------------------------------------------------------
# Deterministic parameter initialization (synthetic, mirrors module shapes)
# ----------------------------------------------------------------------------
def init_eegnet_params(key, H, freq):
    K1, K3 = freq // 2, freq // 4
    ks = jax.random.split(key, 13)
    n = lambda k, s: 0.1 * jax.random.normal(k, s, jnp.float32)
    eps = 1e-5

    w1 = n(ks[0], (4, K1))
    g1, be1 = 1.0 + n(ks[1], (4,)), n(ks[2], (4,))
    w2 = n(ks[3], (8, H)); b2 = n(ks[4], (8,))
    g2, be2 = 1.0 + n(ks[5], (8,)), n(ks[6], (8,))
    w3 = n(ks[7], (8, K3)); b3 = n(ks[8], (8,))
    w4 = n(ks[9], (8, 8)); b4 = n(ks[10], (8,))
    g3, be3 = 1.0 + n(ks[11], (8,)), n(ks[12], (8,))

    # BN eval with running_mean=0, running_var=1 -> per-channel affine
    return dict(
        w1=w1,
        bn1_s=g1 / jnp.sqrt(1.0 + eps), bn1_b=be1,
        w2=w2, b2=b2,
        bn2_s=g2 / jnp.sqrt(1.0 + eps), bn2_b=be2,
        w3=w3, b3=b3, w4=w4, b4=b4,
        bn3_s=g3 / jnp.sqrt(1.0 + eps), bn3_b=be3,
    )


# ----------------------------------------------------------------------------
# Pure-JAX reference (XLA convs / reduce_window) for verification
# ----------------------------------------------------------------------------
def eegnet_ref(x, p, freq):
    B, H, T = x.shape
    K1, P1, K3, P3 = freq // 2, freq // 4, freq // 4, freq // 4
    dn = ("NCHW", "OIHW", "NCHW")
    hp = lax.Precision.HIGHEST
    y = lax.conv_general_dilated(x[:, None], p["w1"].reshape(4, 1, 1, K1), (1, 1),
                                 [(0, 0), (P1, P1)], dimension_numbers=dn, precision=hp)
    y = y * p["bn1_s"].reshape(1, 4, 1, 1) + p["bn1_b"].reshape(1, 4, 1, 1)
    y = lax.conv_general_dilated(y, p["w2"].reshape(8, 1, H, 1), (1, 1),
                                 [(0, 0), (0, 0)], dimension_numbers=dn,
                                 feature_group_count=4, precision=hp)
    y = y + p["b2"].reshape(1, 8, 1, 1)
    y = y * p["bn2_s"].reshape(1, 8, 1, 1) + p["bn2_b"].reshape(1, 8, 1, 1)
    y = jax.nn.elu(y)
    y = lax.reduce_window(y, 0.0, lax.add, (1, 1, 1, 4), (1, 1, 1, 4), "VALID") / 4.0
    y = lax.conv_general_dilated(y, p["w3"].reshape(8, 1, 1, K3), (1, 1),
                                 [(0, 0), (P3, P3)], dimension_numbers=dn,
                                 feature_group_count=8, precision=hp)
    y = y + p["b3"].reshape(1, 8, 1, 1)
    y = lax.conv_general_dilated(y, p["w4"].reshape(8, 8, 1, 1), (1, 1),
                                 [(0, 0), (0, 0)], dimension_numbers=dn, precision=hp)
    y = y + p["b4"].reshape(1, 8, 1, 1)
    y = y * p["bn3_s"].reshape(1, 8, 1, 1) + p["bn3_b"].reshape(1, 8, 1, 1)
    y = jax.nn.elu(y)
    y = lax.reduce_window(y, 0.0, lax.add, (1, 1, 1, 8), (1, 1, 1, 8), "VALID") / 8.0
    return y[:, :, 0, :]                           # squeeze height (= torch .squeeze())


def net_ref(x0, x1, p0, p1, W_cls, b_cls, freq):
    B = x0.shape[0]
    rf0 = eegnet_ref(x0, p0, freq)
    rf1 = eegnet_ref(x1.reshape(B, 1, -1), p1, freq)
    r_flat = jnp.concatenate([rf0, rf1], axis=1).reshape(B, -1)
    r_logits = jnp.dot(r_flat, W_cls.T, precision=lax.Precision.HIGHEST) + b_cls
    return jax.nn.softmax(r_logits, axis=-1)


# ----------------------------------------------------------------------------
# Main
# ----------------------------------------------------------------------------
if __name__ == "__main__":
    B, n_channels, n_classes, freq = 2, 4, 3, 32
    T = freq

    key = jax.random.PRNGKey(0)
    kx0, kx1, kp0, kp1, kw, kb, kbx0, kbx1 = jax.random.split(key, 8)

    # modality inputs (data_resize is a pass-through)
    x0 = jax.random.normal(kx0, (B, n_channels, T), jnp.float32)   # modality 0
    x1 = jax.random.normal(kx1, (B, T), jnp.float32)               # modality 1

    p0 = init_eegnet_params(kp0, n_channels, freq)
    p1 = init_eegnet_params(kp1, 1, freq)

    # Architecture-derived feature dims (freq=32: W1=33, Wp1=8, W3=17, Wp2=2 -> 16/mod)
    K1, K3 = freq // 2, freq // 4
    W1 = T + 2 * (freq // 4) - K1 + 1
    Wp1 = W1 // 4
    W3 = Wp1 + 2 * K3 - K3 + 1
    Wp2 = W3 // 8
    feat_dim = 8 * Wp2
    F_in = feat_dim * 2

    W_cls = 0.1 * jax.random.normal(kw, (n_classes, F_in), jnp.float32)   # torch (C, F)
    b_cls = 0.1 * jax.random.normal(kb, (n_classes,), jnp.float32)

    # ---- Host-side fold into per-modality dense matrices (float64, no runtime cost) ----
    Wnp = np.asarray(W_cls, np.float64)
    M0, b2f0, Q0, b3f0, C0 = build_modality_matrices(p0, n_channels, T, Wnp[:, :feat_dim])
    M1, b2f1, Q1, b3f1, C1 = build_modality_matrices(p1, 1, T, Wnp[:, feat_dim:])

    # Weight slabs in bf16 (halves DMA + native MXU path); biases stay f32.
    wbf = lambda a: jnp.asarray(a, dtype=jnp.bfloat16)
    wf32 = lambda a: jnp.asarray(a, dtype=jnp.float32)
    params = dict(
        M0=wbf(M0), M1=wbf(M1),
        b2_0=wf32(b2f0[None, :]), b2_1=wf32(b2f1[None, :]),
        Q0=wbf(Q0), Q1=wbf(Q1),
        b3_0=wf32(b3f0[None, :]), b3_1=wf32(b3f1[None, :]),
        Cls0=wbf(C0), Cls1=wbf(C1),
        bcls=wf32(np.asarray(b_cls)[None, :]),
    )

    # bf16 weights + approx reciprocal -> slightly wider tolerance than pure f32.
    ATOL = RTOL = 5e-3

    # ---- tiny-batch (no-grid) path ----
    out = fused_net_forward(x0.reshape(B, -1), x1.reshape(B, -1), params)
    out = jax.block_until_ready(out)
    r_out = net_ref(x0, x1, p0, p1, W_cls, b_cls, freq)
    if not jnp.allclose(out, r_out, atol=ATOL, rtol=RTOL):
        raise AssertionError(f"tiny-batch mismatch: pallas={out}, ref={r_out}")

    # ---- streaming-batch (grid) path: weights VMEM-resident, batch tiles parallel ----
    Bb = 512
    x0b = jax.random.normal(kbx0, (Bb, n_channels, T), jnp.float32)
    x1b = jax.random.normal(kbx1, (Bb, T), jnp.float32)
    outb = fused_net_forward(x0b.reshape(Bb, -1), x1b.reshape(Bb, -1), params,
                             batch_tile=256)
    outb = jax.block_until_ready(outb)
    r_outb = net_ref(x0b, x1b, p0, p1, W_cls, b_cls, freq)
    if not jnp.allclose(outb, r_outb, atol=ATOL, rtol=RTOL):
        err = jnp.max(jnp.abs(outb - r_outb))
        raise AssertionError(f"batched mismatch: max_abs_err={err}")

    print("KERNEL_OK")
</pallas_src>

<mosaic_0001>
module attributes {stable_mosaic.version = 11 : i64} {
  func.func @fused_net_kernel(%arg0: memref<2x128xf32, #tpu.memory_space<vmem>>, %arg1: memref<2x32xf32, #tpu.memory_space<vmem>>, %arg2: memref<128x264xbf16, #tpu.memory_space<vmem>>, %arg3: memref<32x264xbf16, #tpu.memory_space<vmem>>, %arg4: memref<1x264xf32, #tpu.memory_space<vmem>>, %arg5: memref<1x264xf32, #tpu.memory_space<vmem>>, %arg6: memref<264x136xbf16, #tpu.memory_space<vmem>>, %arg7: memref<264x136xbf16, #tpu.memory_space<vmem>>, %arg8: memref<1x136xf32, #tpu.memory_space<vmem>>, %arg9: memref<1x136xf32, #tpu.memory_space<vmem>>, %arg10: memref<136x3xbf16, #tpu.memory_space<vmem>>, %arg11: memref<136x3xbf16, #tpu.memory_space<vmem>>, %arg12: memref<1x3xf32, #tpu.memory_space<vmem>>, %arg13: memref<2x3xf32, #tpu.memory_space<vmem>>) attributes {dimension_semantics = [], scalar_prefetch = 0 : i64, scratch_operands = 0 : i64, tpu.core_type = #tpu.core_type<tc>} {
    %c0 = arith.constant 0 : index
    %c0_0 = arith.constant 0 : index
    %0 = vector.load %arg0[%c0, %c0_0] : memref<2x128xf32, #tpu.memory_space<vmem>>, vector<2x128xf32>
    %1 = arith.truncf %0 : vector<2x128xf32> to vector<2x128xbf16>
    %c0_1 = arith.constant 0 : index
    %c0_2 = arith.constant 0 : index
    %2 = vector.load %arg2[%c0_1, %c0_2] : memref<128x264xbf16, #tpu.memory_space<vmem>>, vector<128x264xbf16>
    %cst = arith.constant dense<0.000000e+00> : vector<2x264xf32>
    %3 = tpu.matmul %1, %2, %cst {dimension_numbers = #tpu.dot_dimension_numbers<[1], [0], [0], [1], [0, 0, 1, 1], [], []>} : vector<2x128xbf16>, vector<128x264xbf16>, vector<2x264xf32> -> vector<2x264xf32>
    %c0_3 = arith.constant 0 : index
    %c0_4 = arith.constant 0 : index
    %4 = vector.load %arg4[%c0_3, %c0_4] : memref<1x264xf32, #tpu.memory_space<vmem>>, vector<1x264xf32>
    %5 = vector.broadcast %4 : vector<1x264xf32> to vector<2x264xf32>
    %6 = arith.addf %3, %5 : vector<2x264xf32>
    %cst_5 = arith.constant 0.000000e+00 : f32
    %7 = vector.broadcast %cst_5 : f32 to vector<2x264xf32>
    %8 = arith.cmpf ogt, %6, %7 : vector<2x264xf32>
    %cst_6 = arith.constant 0.000000e+00 : f32
    %9 = vector.broadcast %cst_6 : f32 to vector<2x264xf32>
    %10 = arith.minimumf %6, %9 : vector<2x264xf32>
    %11 = math.exp %10 : vector<2x264xf32>
    %cst_7 = arith.constant 1.000000e+00 : f32
    %12 = vector.broadcast %cst_7 : f32 to vector<2x264xf32>
    %13 = arith.subf %11, %12 : vector<2x264xf32>
    %14 = arith.select %8, %6, %13 : vector<2x264xi1>, vector<2x264xf32>
    %c0_8 = arith.constant 0 : index
    %c0_9 = arith.constant 0 : index
    %15 = vector.load %arg1[%c0_8, %c0_9] : memref<2x32xf32, #tpu.memory_space<vmem>>, vector<2x32xf32>
    %16 = arith.truncf %15 : vector<2x32xf32> to vector<2x32xbf16>
    %c0_10 = arith.constant 0 : index
    %c0_11 = arith.constant 0 : index
    %17 = vector.load %arg3[%c0_10, %c0_11] : memref<32x264xbf16, #tpu.memory_space<vmem>>, vector<32x264xbf16>
    %cst_12 = arith.constant dense<0.000000e+00> : vector<2x264xf32>
    %18 = tpu.matmul %16, %17, %cst_12 {dimension_numbers = #tpu.dot_dimension_numbers<[1], [0], [0], [1], [0, 0, 1, 1], [], []>} : vector<2x32xbf16>, vector<32x264xbf16>, vector<2x264xf32> -> vector<2x264xf32>
    %c0_13 = arith.constant 0 : index
    %c0_14 = arith.constant 0 : index
    %19 = vector.load %arg5[%c0_13, %c0_14] : memref<1x264xf32, #tpu.memory_space<vmem>>, vector<1x264xf32>
    %20 = vector.broadcast %19 : vector<1x264xf32> to vector<2x264xf32>
    %21 = arith.addf %18, %20 : vector<2x264xf32>
    %cst_15 = arith.constant 0.000000e+00 : f32
    %22 = vector.broadcast %cst_15 : f32 to vector<2x264xf32>
    %23 = arith.cmpf ogt, %21, %22 : vector<2x264xf32>
    %cst_16 = arith.constant 0.000000e+00 : f32
    %24 = vector.broadcast %cst_16 : f32 to vector<2x264xf32>
    %25 = arith.minimumf %21, %24 : vector<2x264xf32>
    %26 = math.exp %25 : vector<2x264xf32>
    %cst_17 = arith.constant 1.000000e+00 : f32
    %27 = vector.broadcast %cst_17 : f32 to vector<2x264xf32>
    %28 = arith.subf %26, %27 : vector<2x264xf32>
    %29 = arith.select %23, %21, %28 : vector<2x264xi1>, vector<2x264xf32>
    %30 = arith.truncf %14 : vector<2x264xf32> to vector<2x264xbf16>
    %c0_18 = arith.constant 0 : index
    %c0_19 = arith.constant 0 : index
    %31 = vector.load %arg6[%c0_18, %c0_19] : memref<264x136xbf16, #tpu.memory_space<vmem>>, vector<264x136xbf16>
    %cst_20 = arith.constant dense<0.000000e+00> : vector<2x136xf32>
    %32 = tpu.matmul %30, %31, %cst_20 {dimension_numbers = #tpu.dot_dimension_numbers<[1], [0], [0], [1], [0, 0, 1, 1], [], []>} : vector<2x264xbf16>, vector<264x136xbf16>, vector<2x136xf32> -> vector<2x136xf32>
    %c0_21 = arith.constant 0 : index
    %c0_22 = arith.constant 0 : index
    %33 = vector.load %arg8[%c0_21, %c0_22] : memref<1x136xf32, #tpu.memory_space<vmem>>, vector<1x136xf32>
    %34 = vector.broadcast %33 : vector<1x136xf32> to vector<2x136xf32>
    %35 = arith.addf %32, %34 : vector<2x136xf32>
    %cst_23 = arith.constant 0.000000e+00 : f32
    %36 = vector.broadcast %cst_23 : f32 to vector<2x136xf32>
    %37 = arith.cmpf ogt, %35, %36 : vector<2x136xf32>
    %cst_24 = arith.constant 0.000000e+00 : f32
    %38 = vector.broadcast %cst_24 : f32 to vector<2x136xf32>
    %39 = arith.minimumf %35, %38 : vector<2x136xf32>
    %40 = math.exp %39 : vector<2x136xf32>
    %cst_25 = arith.constant 1.000000e+00 : f32
    %41 = vector.broadcast %cst_25 : f32 to vector<2x136xf32>
    %42 = arith.subf %40, %41 : vector<2x136xf32>
    %43 = arith.select %37, %35, %42 : vector<2x136xi1>, vector<2x136xf32>
    %44 = arith.truncf %29 : vector<2x264xf32> to vector<2x264xbf16>
    %c0_26 = arith.constant 0 : index
    %c0_27 = arith.constant 0 : index
    %45 = vector.load %arg7[%c0_26, %c0_27] : memref<264x136xbf16, #tpu.memory_space<vmem>>, vector<264x136xbf16>
    %cst_28 = arith.constant dense<0.000000e+00> : vector<2x136xf32>
    %46 = tpu.matmul %44, %45, %cst_28 {dimension_numbers = #tpu.dot_dimension_numbers<[1], [0], [0], [1], [0, 0, 1, 1], [], []>} : vector<2x264xbf16>, vector<264x136xbf16>, vector<2x136xf32> -> vector<2x136xf32>
    %c0_29 = arith.constant 0 : index
    %c0_30 = arith.constant 0 : index
    %47 = vector.load %arg9[%c0_29, %c0_30] : memref<1x136xf32, #tpu.memory_space<vmem>>, vector<1x136xf32>
    %48 = vector.broadcast %47 : vector<1x136xf32> to vector<2x136xf32>
    %49 = arith.addf %46, %48 : vector<2x136xf32>
    %cst_31 = arith.constant 0.000000e+00 : f32
    %50 = vector.broadcast %cst_31 : f32 to vector<2x136xf32>
    %51 = arith.cmpf ogt, %49, %50 : vector<2x136xf32>
    %cst_32 = arith.constant 0.000000e+00 : f32
    %52 = vector.broadcast %cst_32 : f32 to vector<2x136xf32>
    %53 = arith.minimumf %49, %52 : vector<2x136xf32>
    %54 = math.exp %53 : vector<2x136xf32>
    %cst_33 = arith.constant 1.000000e+00 : f32
    %55 = vector.broadcast %cst_33 : f32 to vector<2x136xf32>
    %56 = arith.subf %54, %55 : vector<2x136xf32>
    %57 = arith.select %51, %49, %56 : vector<2x136xi1>, vector<2x136xf32>
    %58 = arith.truncf %43 : vector<2x136xf32> to vector<2x136xbf16>
    %c0_34 = arith.constant 0 : index
    %c0_35 = arith.constant 0 : index
    %59 = vector.load %arg10[%c0_34, %c0_35] : memref<136x3xbf16, #tpu.memory_space<vmem>>, vector<136x3xbf16>
    %cst_36 = arith.constant dense<0.000000e+00> : vector<2x3xf32>
    %60 = tpu.matmul %58, %59, %cst_36 {dimension_numbers = #tpu.dot_dimension_numbers<[1], [0], [0], [1], [0, 0, 1, 1], [], []>} : vector<2x136xbf16>, vector<136x3xbf16>, vector<2x3xf32> -> vector<2x3xf32>
    %61 = arith.truncf %57 : vector<2x136xf32> to vector<2x136xbf16>
    %c0_37 = arith.constant 0 : index
    %c0_38 = arith.constant 0 : index
    %62 = vector.load %arg11[%c0_37, %c0_38] : memref<136x3xbf16, #tpu.memory_space<vmem>>, vector<136x3xbf16>
    %cst_39 = arith.constant dense<0.000000e+00> : vector<2x3xf32>
    %63 = tpu.matmul %61, %62, %cst_39 {dimension_numbers = #tpu.dot_dimension_numbers<[1], [0], [0], [1], [0, 0, 1, 1], [], []>} : vector<2x136xbf16>, vector<136x3xbf16>, vector<2x3xf32> -> vector<2x3xf32>
    %64 = arith.addf %60, %63 : vector<2x3xf32>
    %c0_40 = arith.constant 0 : index
    %c0_41 = arith.constant 0 : index
    %65 = vector.load %arg12[%c0_40, %c0_41] : memref<1x3xf32, #tpu.memory_space<vmem>>, vector<1x3xf32>
    %66 = vector.broadcast %65 : vector<1x3xf32> to vector<2x3xf32>
    %67 = arith.addf %64, %66 : vector<2x3xf32>
    %cst_42 = arith.constant dense<0xFF800000> : vector<2xf32>
    %68 = vector.multi_reduction <maximumf>, %67, %cst_42 [1] : vector<2x3xf32> to vector<2xf32>
    %69 = vector.shape_cast %68 : vector<2xf32> to vector<2x1xf32>
    %70 = vector.broadcast %69 : vector<2x1xf32> to vector<2x3xf32>
    %71 = arith.subf %67, %70 : vector<2x3xf32>
    %72 = math.exp %71 : vector<2x3xf32>
    %cst_43 = arith.constant dense<0.000000e+00> : vector<2xf32>
    %73 = vector.multi_reduction <add>, %72, %cst_43 [1] : vector<2x3xf32> to vector<2xf32>
    %74 = vector.shape_cast %73 : vector<2xf32> to vector<2x1xf32>
    %75 = tpu.reciprocal %74 {approx = true} : vector<2x1xf32> -> vector<2x1xf32>
    %76 = vector.broadcast %75 : vector<2x1xf32> to vector<2x3xf32>
    %77 = arith.mulf %72, %76 : vector<2x3xf32>
    %c0_44 = arith.constant 0 : index
    %c0_45 = arith.constant 0 : index
    %78 = vector.load %arg13[%c0_44, %c0_45] : memref<2x3xf32, #tpu.memory_space<vmem>>, vector<2x3xf32>
    tpu.vector_store %arg13[%c0_44, %c0_45], %77 {strides = array<i32>} : memref<2x3xf32, #tpu.memory_space<vmem>>, vector<2x3xf32>,
    return
  }
}

</mosaic_0001>

<llo_original>
// kernel: tpu_custom_call.1
$region0: #{tpu_custom_call.1}
  #allocation0 [shape = 'u32[]', space=smem, size = 0x4, offset = 0x4, fixed_abs, tag = 'smem constant byte address 0x4 - core index']
  #allocation1 [shape = 'u32[72,128]{1,0:T(1,128)}', space=vmem, size = 0x9000, scoped, tag = 'internal scratch']
  %s0 = inlined_call_operand.vmem [shape: f32[2,128], index: 0, kind: input, shape index: {}]
  %s1 = inlined_call_operand.vmem [shape: f32[2,32], index: 1, kind: input, shape index: {}]
  %s2 = inlined_call_operand.vmem [shape: bf16[128,264], index: 2, kind: input, shape index: {}]
  %s3 = inlined_call_operand.vmem [shape: bf16[32,264], index: 3, kind: input, shape index: {}]
  %s4 = inlined_call_operand.vmem [shape: f32[1,264], index: 4, kind: input, shape index: {}]
  %s5 = inlined_call_operand.vmem [shape: f32[1,264], index: 5, kind: input, shape index: {}]
  %s6 = inlined_call_operand.vmem [shape: bf16[264,136], index: 6, kind: input, shape index: {}]
  %s7 = inlined_call_operand.vmem [shape: bf16[264,136], index: 7, kind: input, shape index: {}]
  %s8 = inlined_call_operand.vmem [shape: f32[1,136], index: 8, kind: input, shape index: {}]
  %s9 = inlined_call_operand.vmem [shape: f32[1,136], index: 9, kind: input, shape index: {}]
  %s10 = inlined_call_operand.vmem [shape: bf16[136,3], index: 10, kind: input, shape index: {}]
  %s11 = inlined_call_operand.vmem [shape: bf16[136,3], index: 11, kind: input, shape index: {}]
  %s12 = inlined_call_operand.vmem [shape: f32[1,3], index: 12, kind: input, shape index: {}]
  %s13 = inlined_call_operand.hbm [shape: f32[2,3], index: 13, kind: output, shape index: {}]
  %s14 = sld [smem:[#allocation0]]
  $region62: #{tpu_custom_call.1} parent=0
    _
  %s16 = ssub.s32 1, %s14
  %s17 = scalar_select 0, %s16, %s14
  $region1: #{tpu_custom_call.1} parent=0
    #allocation2 [shape = 'u8[1024]{0}', space=vmem, size = 0x400, scoped, tag = 'output window, operand 0, single buffered']
    #allocation3 [shape = 's32[1]{0}', space=sflag, size = 0x4, scoped, tag = 'scoped memory for tpu_custom_call.1']
    %18 = vsyncpa [#allocation3], 0
    // Predicated region
    $region2: #{tpu_custom_call.1} parent=1 // pred_check
      _
    $region3: #{tpu_custom_call.1} parent=1 // pred_check_branch
      %20 = sbr.rel (0) target = $region5
    $region4: #{tpu_custom_call.1} parent=1 // pred_region
      _
    $region5: #{tpu_custom_call.1} parent=1 // pred_fallthru
      _
    // Predicated region
    $region6: #{tpu_custom_call.1} parent=1 // pred_check
      _
    $region7: #{tpu_custom_call.1} parent=1 // pred_check_branch
      %22 = sbr.rel (0) target = $region9
    $region8: #{tpu_custom_call.1} parent=1 // pred_region
      _
    $region9: #{tpu_custom_call.1} parent=1 // pred_fallthru
      _
    // Predicated region
    $region10: #{tpu_custom_call.1} parent=1 // pred_check
      _
    $region11: #{tpu_custom_call.1} parent=1 // pred_check_branch
      %24 = sbr.rel (0) target = $region13
    $region12: #{tpu_custom_call.1} parent=1 // pred_region
      _
    $region13: #{tpu_custom_call.1} parent=1 // pred_fallthru
      _
    // Predicated region
    $region14: #{tpu_custom_call.1} parent=1 // pred_check
      _
    $region15: #{tpu_custom_call.1} parent=1 // pred_check_branch
      %26 = sbr.rel (0) target = $region17
    $region16: #{tpu_custom_call.1} parent=1 // pred_region
      _
    $region17: #{tpu_custom_call.1} parent=1 // pred_fallthru
      _
    // Predicated region
    $region18: #{tpu_custom_call.1} parent=1 // pred_check
      _
    $region19: #{tpu_custom_call.1} parent=1 // pred_check_branch
      %28 = sbr.rel (0) target = $region21
    $region20: #{tpu_custom_call.1} parent=1 // pred_region
      _
    $region21: #{tpu_custom_call.1} parent=1 // pred_fallthru
      _
    // Predicated region
    $region22: #{tpu_custom_call.1} parent=1 // pred_check
      _
    $region23: #{tpu_custom_call.1} parent=1 // pred_check_branch
      %30 = sbr.rel (0) target = $region25
    $region24: #{tpu_custom_call.1} parent=1 // pred_region
      _
    $region25: #{tpu_custom_call.1} parent=1 // pred_fallthru
      _
    // Predicated region
    $region26: #{tpu_custom_call.1} parent=1 // pred_check
      _
    $region27: #{tpu_custom_call.1} parent=1 // pred_check_branch
      %32 = sbr.rel (0) target = $region29
    $region28: #{tpu_custom_call.1} parent=1 // pred_region
      _
    $region29: #{tpu_custom_call.1} parent=1 // pred_fallthru
      _
    // Predicated region
    $region30: #{tpu_custom_call.1} parent=1 // pred_check
      _
    $region31: #{tpu_custom_call.1} parent=1 // pred_check_branch
      %34 = sbr.rel (0) target = $region33
    $region32: #{tpu_custom_call.1} parent=1 // pred_region
      _
    $region33: #{tpu_custom_call.1} parent=1 // pred_fallthru
      _
    // Predicated region
    $region34: #{tpu_custom_call.1} parent=1 // pred_check
      _
    $region35: #{tpu_custom_call.1} parent=1 // pred_check_branch
      %36 = sbr.rel (0) target = $region37
    $region36: #{tpu_custom_call.1} parent=1 // pred_region
      _
    $region37: #{tpu_custom_call.1} parent=1 // pred_fallthru
      _
    // Predicated region
    $region38: #{tpu_custom_call.1} parent=1 // pred_check
      _
    $region39: #{tpu_custom_call.1} parent=1 // pred_check_branch
      %38 = sbr.rel (0) target = $region41
    $region40: #{tpu_custom_call.1} parent=1 // pred_region
      _
    $region41: #{tpu_custom_call.1} parent=1 // pred_fallthru
      _
    // Predicated region
    $region42: #{tpu_custom_call.1} parent=1 // pred_check
      _
    $region43: #{tpu_custom_call.1} parent=1 // pred_check_branch
      %40 = sbr.rel (0) target = $region45
    $region44: #{tpu_custom_call.1} parent=1 // pred_region
      _
    $region45: #{tpu_custom_call.1} parent=1 // pred_fallthru
      _
    // Predicated region
    $region46: #{tpu_custom_call.1} parent=1 // pred_check
      _
    $region47: #{tpu_custom_call.1} parent=1 // pred_check_branch
      %42 = sbr.rel (0) target = $region49
    $region48: #{tpu_custom_call.1} parent=1 // pred_region
      _
    $region49: #{tpu_custom_call.1} parent=1 // pred_fallthru
      _
    // Predicated region
    $region50: #{tpu_custom_call.1} parent=1 // pred_check
      _
    $region51: #{tpu_custom_call.1} parent=1 // pred_check_branch
      %44 = sbr.rel (0) target = $region53
    $region52: #{tpu_custom_call.1} parent=1 // pred_region
      _
    $region53: #{tpu_custom_call.1} parent=1 // pred_fallthru
      _
    %v46 = vld [vmem:[%s0] sm:$0x3]
    %v47 = vpack.c.bf16 %v46, %v46
    %v48 = vld [vmem:[%s2] sm:$0xff]
    %v49 = vld [vmem:[%s2 + $0x8] sm:$0xf]
    %v50 = vld [vmem:[%s2 + $0xc] sm:$0xff]
    %v51 = vld [vmem:[%s2 + $0x14] sm:$0xf]
    %v52 = vld [vmem:[%s2 + $0x18] sm:$0xff]
    %v53 = vld [vmem:[%s2 + $0x20] sm:$0xf]
    %v54 = vld [vmem:[%s2 + $0x24] sm:$0xff]
    %v55 = vld [vmem:[%s2 + $0x2c] sm:$0xf]
    %v56 = vld [vmem:[%s2 + $0x30] sm:$0xff]
    %v57 = vld [vmem:[%s2 + $0x38] sm:$0xf]
    %v58 = vld [vmem:[%s2 + $0x3c] sm:$0xff]
    %v59 = vld [vmem:[%s2 + $0x44] sm:$0xf]
    %v60 = vld [vmem:[%s2 + $0x48] sm:$0xff]
    %v61 = vld [vmem:[%s2 + $0x50] sm:$0xf]
    %v62 = vld [vmem:[%s2 + $0x54] sm:$0xff]
    %v63 = vld [vmem:[%s2 + $0x5c] sm:$0xf]
    %v64 = vld [vmem:[%s2 + $0x60] sm:$0xff]
    %v65 = vld [vmem:[%s2 + $0x68] sm:$0xf]
    %v66 = vld [vmem:[%s2 + $0x6c] sm:$0xff]
    %v67 = vld [vmem:[%s2 + $0x74] sm:$0xf]
    %v68 = vld [vmem:[%s2 + $0x78] sm:$0xff]
    %v69 = vld [vmem:[%s2 + $0x80] sm:$0xf]
    %v70 = vld [vmem:[%s2 + $0x84] sm:$0xff]
    %v71 = vld [vmem:[%s2 + $0x8c] sm:$0xf]
    %v72 = vld [vmem:[%s2 + $0x90] sm:$0xff]
    %v73 = vld [vmem:[%s2 + $0x98] sm:$0xf]
    %v74 = vld [vmem:[%s2 + $0x9c] sm:$0xff]
    %v75 = vld [vmem:[%s2 + $0xa4] sm:$0xf]
    %v76 = vld [vmem:[%s2 + $0xa8] sm:$0xff]
    %v77 = vld [vmem:[%s2 + $0xb0] sm:$0xf]
    %v78 = vld [vmem:[%s2 + $0xb4] sm:$0xff]
    %v79 = vld [vmem:[%s2 + $0xbc] sm:$0xf]
    %v80 = vld [vmem:[%s4] sm:$0x7]
    %v82 = vperm.slane %v80, 0
    %v83 = vperm.slane %v80, 1
    %v84 = vperm.slane %v80, 2
    %v120 = vunpack.c.l.b16 %v48
    %v121 = vunpack.c.h.b16 %v48
    %v122 = vunpack.c.l.b16 %v49
    %v123 = vunpack.c.l.b16 %v50
    %v124 = vunpack.c.h.b16 %v50
    %v125 = vunpack.c.l.b16 %v51
    %v126 = vunpack.c.l.b16 %v52
    %v127 = vunpack.c.h.b16 %v52
    %v128 = vunpack.c.l.b16 %v53
    %v129 = vunpack.c.l.b16 %v54
    %v130 = vunpack.c.h.b16 %v54
    %v131 = vunpack.c.l.b16 %v55
    %v132 = vunpack.c.l.b16 %v56
    %v133 = vunpack.c.h.b16 %v56
    %v134 = vunpack.c.l.b16 %v57
    %v135 = vunpack.c.l.b16 %v58
    %v136 = vunpack.c.h.b16 %v58
    %v137 = vunpack.c.l.b16 %v59
    %v138 = vunpack.c.l.b16 %v60
    %v139 = vunpack.c.h.b16 %v60
    %v140 = vunpack.c.l.b16 %v61
    %v141 = vunpack.c.l.b16 %v62
    %v142 = vunpack.c.h.b16 %v62
    %v143 = vunpack.c.l.b16 %v63
    %v144 = vunpack.c.l.b16 %v64
    %v145 = vunpack.c.h.b16 %v64
    %v146 = vunpack.c.l.b16 %v65
    %v147 = vunpack.c.l.b16 %v66
    %v148 = vunpack.c.h.b16 %v66
    %v149 = vunpack.c.l.b16 %v67
    %v150 = vunpack.c.l.b16 %v68
    %v151 = vunpack.c.h.b16 %v68
    %v152 = vunpack.c.l.b16 %v69
    %v153 = vunpack.c.l.b16 %v70
    %v154 = vunpack.c.h.b16 %v70
    %v155 = vunpack.c.l.b16 %v71
    %v156 = vunpack.c.l.b16 %v72
    %v157 = vunpack.c.h.b16 %v72
    %v158 = vunpack.c.l.b16 %v73
    %v159 = vunpack.c.l.b16 %v74
    %v160 = vunpack.c.h.b16 %v74
    %v161 = vunpack.c.l.b16 %v75
    %v162 = vunpack.c.l.b16 %v76
    %v163 = vunpack.c.h.b16 %v76
    %v164 = vunpack.c.l.b16 %v77
    %v165 = vunpack.c.l.b16 %v78
    %v166 = vunpack.c.h.b16 %v78
    %v167 = vunpack.c.l.b16 %v79
    %v168 = vpack.c.b16 %v123, %v120
    %v169 = vpack.c.b16 %v124, %v121
    %v170 = vpack.c.b16 %v125, %v122
    %v171 = vpack.c.b16 %v129, %v126
    %v172 = vpack.c.b16 %v130, %v127
    %v173 = vpack.c.b16 %v131, %v128
    %v174 = vpack.c.b16 %v135, %v132
    %v175 = vpack.c.b16 %v136, %v133
    %v176 = vpack.c.b16 %v137, %v134
    %v177 = vpack.c.b16 %v141, %v138
    %v178 = vpack.c.b16 %v142, %v139
    %v179 = vpack.c.b16 %v143, %v140
    %v180 = vpack.c.b16 %v147, %v144
    %v181 = vpack.c.b16 %v148, %v145
    %v182 = vpack.c.b16 %v149, %v146
    %v183 = vpack.c.b16 %v153, %v150
    %v184 = vpack.c.b16 %v154, %v151
    %v185 = vpack.c.b16 %v155, %v152
    %v186 = vpack.c.b16 %v159, %v156
    %v187 = vpack.c.b16 %v160, %v157
    %v188 = vpack.c.b16 %v161, %v158
    %v189 = vpack.c.b16 %v165, %v162
    %v190 = vpack.c.b16 %v166, %v163
    %v191 = vpack.c.b16 %v167, %v164
    %216 = vmatpush.bf16.msra.mxu0 %v189
    %217 = vmatpush.bf16.msra.mxu0 %v186
    %218 = vmatpush.bf16.msra.mxu0 %v183
    %219 = vmatpush.bf16.msra.mxu0 %v180
    %220 = vmatpush.bf16.msra.mxu0 %v177
    %221 = vmatpush.bf16.msra.mxu0 %v174
    %222 = vmatpush.bf16.msra.mxu0 %v171
    %223 = vmatpush.bf16.msra.mxu0 %v168
    %224 = vmatmul.bf16.gmra.mxu0 %v47
    %v225 = vpop.f32.mrf.mxu0
    %v226 = vadd.f32 %v82, %v225
    %v227 = vpop.f32.mrf.mxu0
    %228 = vdwg.mxu0
    %229 = vmatpush.bf16.msra.mxu0 %v190
    %230 = vmatpush.bf16.msra.mxu0 %v187
    %231 = vmatpush.bf16.msra.mxu0 %v184
    %232 = vmatpush.bf16.msra.mxu0 %v181
    %233 = vmatpush.bf16.msra.mxu0 %v178
    %234 = vmatpush.bf16.msra.mxu0 %v175
    %235 = vmatpush.bf16.msra.mxu0 %v172
    %236 = vmatpush.bf16.msra.mxu0 %v169
    %237 = vmatmul.bf16.gmra.mxu0 %v47
    %v238 = vpop.f32.mrf.mxu0
    %v239 = vadd.f32 %v83, %v238
    %v240 = vpop.f32.mrf.mxu0
    %241 = vdwg.mxu0
    %242 = vmatpush.bf16.msra.mxu0 %v191
    %243 = vmatpush.bf16.msra.mxu0 %v188
    %244 = vmatpush.bf16.msra.mxu0 %v185
    %245 = vmatpush.bf16.msra.mxu0 %v182
    %246 = vmatpush.bf16.msra.mxu0 %v179
    %247 = vmatpush.bf16.msra.mxu0 %v176
    %248 = vmatpush.bf16.msra.mxu0 %v173
    %249 = vmatpush.bf16.msra.mxu0 %v170
    %250 = vmatmul.bf16.gmra.mxu0 %v47
    %v251 = vpop.f32.mrf.mxu0
    %v252 = vadd.f32 %v84, %v251
    %v253 = vpop.f32.mrf.mxu0
    %254 = vdwg.mxu0
    %vm255 = vcmp.gt.f32.partialorder %v226, 0.0
    %vm256 = vcmp.gt.f32.partialorder %v239, 0.0
    %vm257 = vcmp.gt.f32.partialorder %v252, 0.0
    %v258 = vmin.f32 %v226, 0.0
    %v259 = vmin.f32 %v239, 0.0
    %v260 = vmin.f32 %v252, 0.0
    %v261 = vmul.f32 %v258, 1.442695
    %v262 = vpow.pop %v261
    %v263 = vmul.f32 %v259, 1.442695
    %v264 = vpow.pop %v263
    %v265 = vmul.f32 %v260, 1.442695
    %v266 = vpow.pop %v265
    %v267 = vsub.f32 %v262, 1.0
    %v268 = vsub.f32 %v264, 1.0
    %v269 = vsub.f32 %v266, 1.0
    %v270 = vsel %vm255, %v226, %v267
    %v271 = vsel %vm256, %v239, %v268
    %v272 = vsel %vm257, %v252, %v269
    %v273 = vld [vmem:[%s1] sm:$0x3]
    %v274 = vpack.c.bf16 %v273, %v273
    %v275 = vld [vmem:[%s3] sm:$0xff]
    %v276 = vld [vmem:[%s3 + $0x8] sm:$0xf]
    %v277 = vld [vmem:[%s3 + $0xc] sm:$0xff]
    %v278 = vld [vmem:[%s3 + $0x14] sm:$0xf]
    %v279 = vld [vmem:[%s3 + $0x18] sm:$0xff]
    %v280 = vld [vmem:[%s3 + $0x20] sm:$0xf]
    %v281 = vld [vmem:[%s3 + $0x24] sm:$0xff]
    %v282 = vld [vmem:[%s3 + $0x2c] sm:$0xf]
    %v283 = vld [vmem:[%s5] sm:$0x7]
    %v285 = vperm.slane %v283, 0
    %v286 = vperm.slane %v283, 1
    %v287 = vperm.slane %v283, 2
    %v299 = vunpack.c.l.b16 %v275
    %v300 = vunpack.c.h.b16 %v275
    %v301 = vunpack.c.l.b16 %v276
    %v302 = vunpack.c.l.b16 %v277
    %v303 = vunpack.c.h.b16 %v277
    %v304 = vunpack.c.l.b16 %v278
    %v305 = vunpack.c.l.b16 %v279
    %v306 = vunpack.c.h.b16 %v279
    %v307 = vunpack.c.l.b16 %v280
    %v308 = vunpack.c.l.b16 %v281
    %v309 = vunpack.c.h.b16 %v281
    %v310 = vunpack.c.l.b16 %v282
    %v311 = vpack.c.b16 %v302, %v299
    %v312 = vpack.c.b16 %v303, %v300
    %v313 = vpack.c.b16 %v304, %v301
    %v314 = vpack.c.b16 %v308, %v305
    %v315 = vpack.c.b16 %v309, %v306
    %v316 = vpack.c.b16 %v310, %v307
    %vm323 = vcmask 261120
    %v325 = vsel %vm323, %v274, 0
    %327 = vmatpush.bf16.msra.mxu0 0
    %328 = vmatpush.bf16.msra.mxu0 0
    %329 = vmatpush.bf16.msra.mxu0 0
    %330 = vmatpush.bf16.msra.mxu0 0
    %331 = vmatpush.bf16.msra.mxu0 0
    %332 = vmatpush.bf16.msra.mxu0 0
    %333 = vmatpush.bf16.msra.mxu0 %v314
    %334 = vmatpush.bf16.msra.mxu0 %v311
    %335 = vmatmul.bf16.gmra.mxu0 %v325
    %v336 = vpop.f32.mrf.mxu0
    %v337 = vadd.f32 %v285, %v336
    %v338 = vpop.f32.mrf.mxu0
    %339 = vdwg.mxu0
    %340 = vmatpush.bf16.msra.mxu0 0
    %341 = vmatpush.bf16.msra.mxu0 0
    %342 = vmatpush.bf16.msra.mxu0 0
    %343 = vmatpush.bf16.msra.mxu0 0
    %344 = vmatpush.bf16.msra.mxu0 0
    %345 = vmatpush.bf16.msra.mxu0 0
    %346 = vmatpush.bf16.msra.mxu0 %v315
    %347 = vmatpush.bf16.msra.mxu0 %v312
    %348 = vmatmul.bf16.gmra.mxu0 %v325
    %v349 = vpop.f32.mrf.mxu0
    %v350 = vadd.f32 %v286, %v349
    %v351 = vpop.f32.mrf.mxu0
    %352 = vdwg.mxu0
    %353 = vmatpush.bf16.msra.mxu0 0
    %354 = vmatpush.bf16.msra.mxu0 0
    %355 = vmatpush.bf16.msra.mxu0 0
    %356 = vmatpush.bf16.msra.mxu0 0
    %357 = vmatpush.bf16.msra.mxu0 0
    %358 = vmatpush.bf16.msra.mxu0 0
    %359 = vmatpush.bf16.msra.mxu0 %v316
    %360 = vmatpush.bf16.msra.mxu0 %v313
    %361 = vmatmul.bf16.gmra.mxu0 %v325
    %v362 = vpop.f32.mrf.mxu0
    %v363 = vadd.f32 %v287, %v362
    %v364 = vpop.f32.mrf.mxu0
    %365 = vdwg.mxu0
    %vm366 = vcmp.gt.f32.partialorder %v337, 0.0
    %vm367 = vcmp.gt.f32.partialorder %v350, 0.0
    %vm368 = vcmp.gt.f32.partialorder %v363, 0.0
    %v369 = vmin.f32 %v337, 0.0
    %v370 = vmin.f32 %v350, 0.0
    %v371 = vmin.f32 %v363, 0.0
    %v372 = vmul.f32 %v369, 1.442695
    %v373 = vpow.pop %v372
    %v374 = vmul.f32 %v370, 1.442695
    %v375 = vpow.pop %v374
    %v376 = vmul.f32 %v371, 1.442695
    %v377 = vpow.pop %v376
    %v378 = vsub.f32 %v373, 1.0
    %v379 = vsub.f32 %v375, 1.0
    %v380 = vsub.f32 %v377, 1.0
    %v381 = vsel %vm366, %v337, %v378
    %v382 = vsel %vm367, %v350, %v379
    %v383 = vsel %vm368, %v363, %v380
    %v384 = vpack.c.bf16 %v270, %v270
    %v385 = vpack.c.bf16 %v271, %v271
    %v386 = vpack.c.bf16 %v272, %v272
    %v387 = vld [vmem:[%s6] sm:$0xff]
    %v388 = vld [vmem:[%s6 + $0x8] sm:$0xff]
    %v389 = vld [vmem:[%s6 + $0x10] sm:$0xff]
    %v390 = vld [vmem:[%s6 + $0x18] sm:$0xff]
    %v391 = vld [vmem:[%s6 + $0x20] sm:$0xff]
    %v392 = vld [vmem:[%s6 + $0x28] sm:$0xff]
    %v393 = vld [vmem:[%s6 + $0x30] sm:$0xff]
    %v394 = vld [vmem:[%s6 + $0x38] sm:$0xff]
    %v395 = vld [vmem:[%s6 + $0x40] sm:$0xff]
    %v396 = vld [vmem:[%s6 + $0x48] sm:$0xff]
    %v397 = vld [vmem:[%s6 + $0x50] sm:$0xff]
    %v398 = vld [vmem:[%s6 + $0x58] sm:$0xff]
    %v399 = vld [vmem:[%s6 + $0x60] sm:$0xff]
    %v400 = vld [vmem:[%s6 + $0x68] sm:$0xff]
    %v401 = vld [vmem:[%s6 + $0x70] sm:$0xff]
    %v402 = vld [vmem:[%s6 + $0x78] sm:$0xff]
    %v403 = vld [vmem:[%s6 + $0x80] sm:$0xff]
    %v404 = vld [vmem:[%s6 + $0x88] sm:$0xff]
    %v405 = vld [vmem:[%s6 + $0x90] sm:$0xff]
    %v406 = vld [vmem:[%s6 + $0x98] sm:$0xff]
    %v407 = vld [vmem:[%s6 + $0xa0] sm:$0xff]
    %v408 = vld [vmem:[%s6 + $0xa8] sm:$0xff]
    %v409 = vld [vmem:[%s6 + $0xb0] sm:$0xff]
    %v410 = vld [vmem:[%s6 + $0xb8] sm:$0xff]
    %v411 = vld [vmem:[%s6 + $0xc0] sm:$0xff]
    %v412 = vld [vmem:[%s6 + $0xc8] sm:$0xff]
    %v413 = vld [vmem:[%s6 + $0xd0] sm:$0xff]
    %v414 = vld [vmem:[%s6 + $0xd8] sm:$0xff]
    %v415 = vld [vmem:[%s6 + $0xe0] sm:$0xff]
    %v416 = vld [vmem:[%s6 + $0xe8] sm:$0xff]
    %v417 = vld [vmem:[%s6 + $0xf0] sm:$0xff]
    %v418 = vld [vmem:[%s6 + $0xf8] sm:$0xff]
    %v419 = vld [vmem:[%s6 + $0x100] sm:$0xff]
    %v420 = vld [vmem:[%s8] sm:$0x3]
    %v422 = vperm.slane %v420, 0
    %v423 = vperm.slane %v420, 1
    %v459 = vunpack.c.l.b16 %v387
    %v460 = vunpack.c.h.b16 %v387
    %v461 = vunpack.c.l.b16 %v388
    %v462 = vunpack.c.h.b16 %v388
    %v463 = vunpack.c.l.b16 %v389
    %v464 = vunpack.c.h.b16 %v389
    %v465 = vunpack.c.l.b16 %v390
    %v466 = vunpack.c.h.b16 %v390
    %v467 = vunpack.c.l.b16 %v391
    %v468 = vunpack.c.h.b16 %v391
    %v469 = vunpack.c.l.b16 %v392
    %v470 = vunpack.c.h.b16 %v392
    %v471 = vunpack.c.l.b16 %v393
    %v472 = vunpack.c.h.b16 %v393
    %v473 = vunpack.c.l.b16 %v394
    %v474 = vunpack.c.h.b16 %v394
    %v475 = vunpack.c.l.b16 %v395
    %v476 = vunpack.c.h.b16 %v395
    %v477 = vunpack.c.l.b16 %v396
    %v478 = vunpack.c.h.b16 %v396
    %v479 = vunpack.c.l.b16 %v397
    %v480 = vunpack.c.h.b16 %v397
    %v481 = vunpack.c.l.b16 %v398
    %v482 = vunpack.c.h.b16 %v398
    %v483 = vunpack.c.l.b16 %v399
    %v484 = vunpack.c.h.b16 %v399
    %v485 = vunpack.c.l.b16 %v400
    %v486 = vunpack.c.h.b16 %v400
    %v487 = vunpack.c.l.b16 %v401
    %v488 = vunpack.c.h.b16 %v401
    %v489 = vunpack.c.l.b16 %v402
    %v490 = vunpack.c.h.b16 %v402
    %v491 = vunpack.c.l.b16 %v403
    %v492 = vunpack.c.h.b16 %v403
    %v493 = vunpack.c.l.b16 %v404
    %v494 = vunpack.c.h.b16 %v404
    %v495 = vunpack.c.l.b16 %v405
    %v496 = vunpack.c.h.b16 %v405
    %v497 = vunpack.c.l.b16 %v406
    %v498 = vunpack.c.h.b16 %v406
    %v499 = vunpack.c.l.b16 %v407
    %v500 = vunpack.c.h.b16 %v407
    %v501 = vunpack.c.l.b16 %v408
    %v502 = vunpack.c.h.b16 %v408
    %v503 = vunpack.c.l.b16 %v409
    %v504 = vunpack.c.h.b16 %v409
    %v505 = vunpack.c.l.b16 %v410
    %v506 = vunpack.c.h.b16 %v410
    %v507 = vunpack.c.l.b16 %v411
    %v508 = vunpack.c.h.b16 %v411
    %v509 = vunpack.c.l.b16 %v412
    %v510 = vunpack.c.h.b16 %v412
    %v511 = vunpack.c.l.b16 %v413
    %v512 = vunpack.c.h.b16 %v413
    %v513 = vunpack.c.l.b16 %v414
    %v514 = vunpack.c.h.b16 %v414
    %v515 = vunpack.c.l.b16 %v415
    %v516 = vunpack.c.h.b16 %v415
    %v517 = vunpack.c.l.b16 %v416
    %v518 = vunpack.c.h.b16 %v416
    %v519 = vunpack.c.l.b16 %v417
    %v520 = vunpack.c.h.b16 %v417
    %v521 = vunpack.c.l.b16 %v418
    %v522 = vunpack.c.h.b16 %v418
    %v523 = vunpack.c.l.b16 %v419
    %v524 = vunpack.c.h.b16 %v419
    %v525 = vpack.c.b16 %v461, %v459
    %v526 = vpack.c.b16 %v462, %v460
    %v527 = vpack.c.b16 %v465, %v463
    %v528 = vpack.c.b16 %v466, %v464
    %v529 = vpack.c.b16 %v469, %v467
    %v530 = vpack.c.b16 %v470, %v468
    %v531 = vpack.c.b16 %v473, %v471
    %v532 = vpack.c.b16 %v474, %v472
    %v533 = vpack.c.b16 %v477, %v475
    %v534 = vpack.c.b16 %v478, %v476
    %v535 = vpack.c.b16 %v481, %v479
    %v536 = vpack.c.b16 %v482, %v480
    %v537 = vpack.c.b16 %v485, %v483
    %v538 = vpack.c.b16 %v486, %v484
    %v539 = vpack.c.b16 %v489, %v487
    %v540 = vpack.c.b16 %v490, %v488
    %v541 = vpack.c.b16 %v493, %v491
    %v542 = vpack.c.b16 %v494, %v492
    %v543 = vpack.c.b16 %v497, %v495
    %v544 = vpack.c.b16 %v498, %v496
    %v545 = vpack.c.b16 %v501, %v499
    %v546 = vpack.c.b16 %v502, %v500
    %v547 = vpack.c.b16 %v505, %v503
    %v548 = vpack.c.b16 %v506, %v504
    %v549 = vpack.c.b16 %v509, %v507
    %v550 = vpack.c.b16 %v510, %v508
    %v551 = vpack.c.b16 %v513, %v511
    %v552 = vpack.c.b16 %v514, %v512
    %v553 = vpack.c.b16 %v517, %v515
    %v554 = vpack.c.b16 %v518, %v516
    %v555 = vpack.c.b16 %v521, %v519
    %v556 = vpack.c.b16 %v522, %v520
    %v557 = vpack.c.b16 %v523, %v523
    %v558 = vpack.c.b16 %v524, %v524
    %vm591 = vcmask 64512
    %v593 = vsel %vm591, %v386, 0
    %vm595 = vcmask 1043456
    %v597 = vsel %vm595, %v557, 0
    %v600 = vsel %vm595, %v558, 0
    %602 = vmatpush.bf16.msra.mxu0 %v539
    %603 = vmatpush.bf16.msra.mxu0 %v537
    %604 = vmatpush.bf16.msra.mxu0 %v535
    %605 = vmatpush.bf16.msra.mxu0 %v533
    %606 = vmatpush.bf16.msra.mxu0 %v531
    %607 = vmatpush.bf16.msra.mxu0 %v529
    %608 = vmatpush.bf16.msra.mxu0 %v527
    %609 = vmatpush.bf16.msra.mxu0 %v525
    %610 = vmatmul.bf16.gmra.mxu0 %v384
    %v611 = vpop.f32.mrf.mxu0
    %v612 = vadd.f32 %v422, %v611
    %v613 = vpop.f32.mrf.mxu0
    %614 = vdwg.mxu0
    %615 = vmatpush.bf16.msra.mxu0 %v555
    %616 = vmatpush.bf16.msra.mxu0 %v553
    %617 = vmatpush.bf16.msra.mxu0 %v551
    %618 = vmatpush.bf16.msra.mxu0 %v549
    %619 = vmatpush.bf16.msra.mxu0 %v547
    %620 = vmatpush.bf16.msra.mxu0 %v545
    %621 = vmatpush.bf16.msra.mxu0 %v543
    %622 = vmatpush.bf16.msra.mxu0 %v541
    %623 = vmatmul.bf16.gmra.mxu0 %v385
    %v624 = vpop.f32.mrf.mxu0
    %v625 = vadd.f32 %v612, %v624
    %v626 = vpop.f32.mrf.mxu0
    %627 = vdwg.mxu0
    %628 = vmatpush.bf16.msra.mxu0 0
    %629 = vmatpush.bf16.msra.mxu0 0
    %630 = vmatpush.bf16.msra.mxu0 0
    %631 = vmatpush.bf16.msra.mxu0 0
    %632 = vmatpush.bf16.msra.mxu0 0
    %633 = vmatpush.bf16.msra.mxu0 0
    %634 = vmatpush.bf16.msra.mxu0 0
    %635 = vmatpush.bf16.msra.mxu0 %v597
    %636 = vmatmul.bf16.gmra.mxu0 %v593
    %v637 = vpop.f32.mrf.mxu0
    %v638 = vadd.f32 %v625, %v637
    %v639 = vpop.f32.mrf.mxu0
    %640 = vdwg.mxu0
    %641 = vmatpush.bf16.msra.mxu0 %v540
    %642 = vmatpush.bf16.msra.mxu0 %v538
    %643 = vmatpush.bf16.msra.mxu0 %v536
    %644 = vmatpush.bf16.msra.mxu0 %v534
    %645 = vmatpush.bf16.msra.mxu0 %v532
    %646 = vmatpush.bf16.msra.mxu0 %v530
    %647 = vmatpush.bf16.msra.mxu0 %v528
    %648 = vmatpush.bf16.msra.mxu0 %v526
    %649 = vmatmul.bf16.gmra.mxu0 %v384
    %v650 = vpop.f32.mrf.mxu0
    %v651 = vadd.f32 %v423, %v650
    %v652 = vpop.f32.mrf.mxu0
    %653 = vdwg.mxu0
    %654 = vmatpush.bf16.msra.mxu0 %v556
    %655 = vmatpush.bf16.msra.mxu0 %v554
    %656 = vmatpush.bf16.msra.mxu0 %v552
    %657 = vmatpush.bf16.msra.mxu0 %v550
    %658 = vmatpush.bf16.msra.mxu0 %v548
    %659 = vmatpush.bf16.msra.mxu0 %v546
    %660 = vmatpush.bf16.msra.mxu0 %v544
    %661 = vmatpush.bf16.msra.mxu0 %v542
    %662 = vmatmul.bf16.gmra.mxu0 %v385
    %v663 = vpop.f32.mrf.mxu0
    %v664 = vadd.f32 %v651, %v663
    %v665 = vpop.f32.mrf.mxu0
    %666 = vdwg.mxu0
    %667 = vmatpush.bf16.msra.mxu0 0
    %668 = vmatpush.bf16.msra.mxu0 0
    %669 = vmatpush.bf16.msra.mxu0 0
    %670 = vmatpush.bf16.msra.mxu0 0
    %671 = vmatpush.bf16.msra.mxu0 0
    %672 = vmatpush.bf16.msra.mxu0 0
    %673 = vmatpush.bf16.msra.mxu0 0
    %674 = vmatpush.bf16.msra.mxu0 %v600
    %675 = vmatmul.bf16.gmra.mxu0 %v593
    %v676 = vpop.f32.mrf.mxu0
    %v677 = vadd.f32 %v664, %v676
    %v678 = vpop.f32.mrf.mxu0
    %679 = vdwg.mxu0
    %vm680 = vcmp.gt.f32.partialorder %v638, 0.0
    %vm681 = vcmp.gt.f32.partialorder %v677, 0.0
    %v682 = vmin.f32 %v638, 0.0
    %v683 = vmin.f32 %v677, 0.0
    %v684 = vmul.f32 %v682, 1.442695
    %v685 = vpow.pop %v684
    %v686 = vmul.f32 %v683, 1.442695
    %v687 = vpow.pop %v686
    %v688 = vsub.f32 %v685, 1.0
    %v689 = vsub.f32 %v687, 1.0
    %v690 = vsel %vm680, %v638, %v688
    %v691 = vsel %vm681, %v677, %v689
    %v692 = vpack.c.bf16 %v381, %v381
    %v693 = vpack.c.bf16 %v382, %v382
    %v694 = vpack.c.bf16 %v383, %v383
    %v695 = vld [vmem:[%s7] sm:$0xff]
    %v696 = vld [vmem:[%s7 + $0x8] sm:$0xff]
    %v697 = vld [vmem:[%s7 + $0x10] sm:$0xff]
    %v698 = vld [vmem:[%s7 + $0x18] sm:$0xff]
    %v699 = vld [vmem:[%s7 + $0x20] sm:$0xff]
    %v700 = vld [vmem:[%s7 + $0x28] sm:$0xff]
    %v701 = vld [vmem:[%s7 + $0x30] sm:$0xff]
    %v702 = vld [vmem:[%s7 + $0x38] sm:$0xff]
    %v703 = vld [vmem:[%s7 + $0x40] sm:$0xff]
    %v704 = vld [vmem:[%s7 + $0x48] sm:$0xff]
    %v705 = vld [vmem:[%s7 + $0x50] sm:$0xff]
    %v706 = vld [vmem:[%s7 + $0x58] sm:$0xff]
    %v707 = vld [vmem:[%s7 + $0x60] sm:$0xff]
    %v708 = vld [vmem:[%s7 + $0x68] sm:$0xff]
    %v709 = vld [vmem:[%s7 + $0x70] sm:$0xff]
    %v710 = vld [vmem:[%s7 + $0x78] sm:$0xff]
    %v711 = vld [vmem:[%s7 + $0x80] sm:$0xff]
    %v712 = vld [vmem:[%s7 + $0x88] sm:$0xff]
    %v713 = vld [vmem:[%s7 + $0x90] sm:$0xff]
    %v714 = vld [vmem:[%s7 + $0x98] sm:$0xff]
    %v715 = vld [vmem:[%s7 + $0xa0] sm:$0xff]
    %v716 = vld [vmem:[%s7 + $0xa8] sm:$0xff]
    %v717 = vld [vmem:[%s7 + $0xb0] sm:$0xff]
    %v718 = vld [vmem:[%s7 + $0xb8] sm:$0xff]
    %v719 = vld [vmem:[%s7 + $0xc0] sm:$0xff]
    %v720 = vld [vmem:[%s7 + $0xc8] sm:$0xff]
    %v721 = vld [vmem:[%s7 + $0xd0] sm:$0xff]
    %v722 = vld [vmem:[%s7 + $0xd8] sm:$0xff]
    %v723 = vld [vmem:[%s7 + $0xe0] sm:$0xff]
    %v724 = vld [vmem:[%s7 + $0xe8] sm:$0xff]
    %v725 = vld [vmem:[%s7 + $0xf0] sm:$0xff]
    %v726 = vld [vmem:[%s7 + $0xf8] sm:$0xff]
    %v727 = vld [vmem:[%s7 + $0x100] sm:$0xff]
    %v728 = vld [vmem:[%s9] sm:$0x3]
    %v730 = vperm.slane %v728, 0
    %v731 = vperm.slane %v728, 1
    %v767 = vunpack.c.l.b16 %v695
    %v768 = vunpack.c.h.b16 %v695
    %v769 = vunpack.c.l.b16 %v696
    %v770 = vunpack.c.h.b16 %v696
    %v771 = vunpack.c.l.b16 %v697
    %v772 = vunpack.c.h.b16 %v697
    %v773 = vunpack.c.l.b16 %v698
    %v774 = vunpack.c.h.b16 %v698
    %v775 = vunpack.c.l.b16 %v699
    %v776 = vunpack.c.h.b16 %v699
    %v777 = vunpack.c.l.b16 %v700
    %v778 = vunpack.c.h.b16 %v700
    %v779 = vunpack.c.l.b16 %v701
    %v780 = vunpack.c.h.b16 %v701
    %v781 = vunpack.c.l.b16 %v702
    %v782 = vunpack.c.h.b16 %v702
    %v783 = vunpack.c.l.b16 %v703
    %v784 = vunpack.c.h.b16 %v703
    %v785 = vunpack.c.l.b16 %v704
    %v786 = vunpack.c.h.b16 %v704
    %v787 = vunpack.c.l.b16 %v705
    %v788 = vunpack.c.h.b16 %v705
    %v789 = vunpack.c.l.b16 %v706
    %v790 = vunpack.c.h.b16 %v706
    %v791 = vunpack.c.l.b16 %v707
    %v792 = vunpack.c.h.b16 %v707
    %v793 = vunpack.c.l.b16 %v708
    %v794 = vunpack.c.h.b16 %v708
    %v795 = vunpack.c.l.b16 %v709
    %v796 = vunpack.c.h.b16 %v709
    %v797 = vunpack.c.l.b16 %v710
    %v798 = vunpack.c.h.b16 %v710
    %v799 = vunpack.c.l.b16 %v711
    %v800 = vunpack.c.h.b16 %v711
    %v801 = vunpack.c.l.b16 %v712
    %v802 = vunpack.c.h.b16 %v712
    %v803 = vunpack.c.l.b16 %v713
    %v804 = vunpack.c.h.b16 %v713
    %v805 = vunpack.c.l.b16 %v714
    %v806 = vunpack.c.h.b16 %v714
    %v807 = vunpack.c.l.b16 %v715
    %v808 = vunpack.c.h.b16 %v715
    %v809 = vunpack.c.l.b16 %v716
    %v810 = vunpack.c.h.b16 %v716
    %v811 = vunpack.c.l.b16 %v717
    %v812 = vunpack.c.h.b16 %v717
    %v813 = vunpack.c.l.b16 %v718
    %v814 = vunpack.c.h.b16 %v718
    %v815 = vunpack.c.l.b16 %v719
    %v816 = vunpack.c.h.b16 %v719
    %v817 = vunpack.c.l.b16 %v720
    %v818 = vunpack.c.h.b16 %v720
    %v819 = vunpack.c.l.b16 %v721
    %v820 = vunpack.c.h.b16 %v721
    %v821 = vunpack.c.l.b16 %v722
    %v822 = vunpack.c.h.b16 %v722
    %v823 = vunpack.c.l.b16 %v723
    %v824 = vunpack.c.h.b16 %v723
    %v825 = vunpack.c.l.b16 %v724
    %v826 = vunpack.c.h.b16 %v724
    %v827 = vunpack.c.l.b16 %v725
    %v828 = vunpack.c.h.b16 %v725
    %v829 = vunpack.c.l.b16 %v726
    %v830 = vunpack.c.h.b16 %v726
    %v831 = vunpack.c.l.b16 %v727
    %v832 = vunpack.c.h.b16 %v727
    %v833 = vpack.c.b16 %v769, %v767
    %v834 = vpack.c.b16 %v770, %v768
    %v835 = vpack.c.b16 %v773, %v771
    %v836 = vpack.c.b16 %v774, %v772
    %v837 = vpack.c.b16 %v777, %v775
    %v838 = vpack.c.b16 %v778, %v776
    %v839 = vpack.c.b16 %v781, %v779
    %v840 = vpack.c.b16 %v782, %v780
    %v841 = vpack.c.b16 %v785, %v783
    %v842 = vpack.c.b16 %v786, %v784
    %v843 = vpack.c.b16 %v789, %v787
    %v844 = vpack.c.b16 %v790, %v788
    %v845 = vpack.c.b16 %v793, %v791
    %v846 = vpack.c.b16 %v794, %v792
    %v847 = vpack.c.b16 %v797, %v795
    %v848 = vpack.c.b16 %v798, %v796
    %v849 = vpack.c.b16 %v801, %v799
    %v850 = vpack.c.b16 %v802, %v800
    %v851 = vpack.c.b16 %v805, %v803
    %v852 = vpack.c.b16 %v806, %v804
    %v853 = vpack.c.b16 %v809, %v807
    %v854 = vpack.c.b16 %v810, %v808
    %v855 = vpack.c.b16 %v813, %v811
    %v856 = vpack.c.b16 %v814, %v812
    %v857 = vpack.c.b16 %v817, %v815
    %v858 = vpack.c.b16 %v818, %v816
    %v859 = vpack.c.b16 %v821, %v819
    %v860 = vpack.c.b16 %v822, %v820
    %v861 = vpack.c.b16 %v825, %v823
    %v862 = vpack.c.b16 %v826, %v824
    %v863 = vpack.c.b16 %v829, %v827
    %v864 = vpack.c.b16 %v830, %v828
    %v865 = vpack.c.b16 %v831, %v831
    %v866 = vpack.c.b16 %v832, %v832
    %v900 = vsel %vm591, %v694, 0
    %v903 = vsel %vm595, %v865, 0
    %v906 = vsel %vm595, %v866, 0
    %908 = vmatpush.bf16.msra.mxu0 %v847
    %909 = vmatpush.bf16.msra.mxu0 %v845
    %910 = vmatpush.bf16.msra.mxu0 %v843
    %911 = vmatpush.bf16.msra.mxu0 %v841
    %912 = vmatpush.bf16.msra.mxu0 %v839
    %913 = vmatpush.bf16.msra.mxu0 %v837
    %914 = vmatpush.bf16.msra.mxu0 %v835
    %915 = vmatpush.bf16.msra.mxu0 %v833
    %916 = vmatmul.bf16.gmra.mxu0 %v692
    %v917 = vpop.f32.mrf.mxu0
    %v918 = vadd.f32 %v730, %v917
    %v919 = vpop.f32.mrf.mxu0
    %920 = vdwg.mxu0
    %921 = vmatpush.bf16.msra.mxu0 %v863
    %922 = vmatpush.bf16.msra.mxu0 %v861
    %923 = vmatpush.bf16.msra.mxu0 %v859
    %924 = vmatpush.bf16.msra.mxu0 %v857
    %925 = vmatpush.bf16.msra.mxu0 %v855
    %926 = vmatpush.bf16.msra.mxu0 %v853
    %927 = vmatpush.bf16.msra.mxu0 %v851
    %928 = vmatpush.bf16.msra.mxu0 %v849
    %929 = vmatmul.bf16.gmra.mxu0 %v693
    %v930 = vpop.f32.mrf.mxu0
    %v931 = vadd.f32 %v918, %v930
    %v932 = vpop.f32.mrf.mxu0
    %933 = vdwg.mxu0
    %934 = vmatpush.bf16.msra.mxu0 0
    %935 = vmatpush.bf16.msra.mxu0 0
    %936 = vmatpush.bf16.msra.mxu0 0
    %937 = vmatpush.bf16.msra.mxu0 0
    %938 = vmatpush.bf16.msra.mxu0 0
    %939 = vmatpush.bf16.msra.mxu0 0
    %940 = vmatpush.bf16.msra.mxu0 0
    %941 = vmatpush.bf16.msra.mxu0 %v903
    %942 = vmatmul.bf16.gmra.mxu0 %v900
    %v943 = vpop.f32.mrf.mxu0
    %v944 = vadd.f32 %v931, %v943
    %v945 = vpop.f32.mrf.mxu0
    %946 = vdwg.mxu0
    %947 = vmatpush.bf16.msra.mxu0 %v848
    %948 = vmatpush.bf16.msra.mxu0 %v846
    %949 = vmatpush.bf16.msra.mxu0 %v844
    %950 = vmatpush.bf16.msra.mxu0 %v842
    %951 = vmatpush.bf16.msra.mxu0 %v840
    %952 = vmatpush.bf16.msra.mxu0 %v838
    %953 = vmatpush.bf16.msra.mxu0 %v836
    %954 = vmatpush.bf16.msra.mxu0 %v834
    %955 = vmatmul.bf16.gmra.mxu0 %v692
    %v956 = vpop.f32.mrf.mxu0
    %v957 = vadd.f32 %v731, %v956
    %v958 = vpop.f32.mrf.mxu0
    %959 = vdwg.mxu0
    %960 = vmatpush.bf16.msra.mxu0 %v864
    %961 = vmatpush.bf16.msra.mxu0 %v862
    %962 = vmatpush.bf16.msra.mxu0 %v860
    %963 = vmatpush.bf16.msra.mxu0 %v858
    %964 = vmatpush.bf16.msra.mxu0 %v856
    %965 = vmatpush.bf16.msra.mxu0 %v854
    %966 = vmatpush.bf16.msra.mxu0 %v852
    %967 = vmatpush.bf16.msra.mxu0 %v850
    %968 = vmatmul.bf16.gmra.mxu0 %v693
    %v969 = vpop.f32.mrf.mxu0
    %v970 = vadd.f32 %v957, %v969
    %v971 = vpop.f32.mrf.mxu0
    %972 = vdwg.mxu0
    %973 = vmatpush.bf16.msra.mxu0 0
    %974 = vmatpush.bf16.msra.mxu0 0
    %975 = vmatpush.bf16.msra.mxu0 0
    %976 = vmatpush.bf16.msra.mxu0 0
    %977 = vmatpush.bf16.msra.mxu0 0
    %978 = vmatpush.bf16.msra.mxu0 0
    %979 = vmatpush.bf16.msra.mxu0 0
    %980 = vmatpush.bf16.msra.mxu0 %v906
    %981 = vmatmul.bf16.gmra.mxu0 %v900
    %v982 = vpop.f32.mrf.mxu0
    %v983 = vadd.f32 %v970, %v982
    %v984 = vpop.f32.mrf.mxu0
    %985 = vdwg.mxu0
    %vm986 = vcmp.gt.f32.partialorder %v944, 0.0
    %vm987 = vcmp.gt.f32.partialorder %v983, 0.0
    %v988 = vmin.f32 %v944, 0.0
    %v989 = vmin.f32 %v983, 0.0
    %v990 = vmul.f32 %v988, 1.442695
    %v991 = vpow.pop %v990
    %v992 = vmul.f32 %v989, 1.442695
    %v993 = vpow.pop %v992
    %v994 = vsub.f32 %v991, 1.0
    %v995 = vsub.f32 %v993, 1.0
    %v996 = vsel %vm986, %v944, %v994
    %v997 = vsel %vm987, %v983, %v995
    %v998 = vpack.c.bf16 %v690, %v690
    %v999 = vpack.c.bf16 %v691, %v691
    %v1000 = vld [vmem:[%s10] sm:$0xf]
    %v1001 = vld [vmem:[%s10 + $0x4] sm:$0xf]
    %v1002 = vld [vmem:[%s10 + $0x8] sm:$0xf]
    %v1003 = vld [vmem:[%s10 + $0xc] sm:$0xf]
    %v1004 = vld [vmem:[%s10 + $0x10] sm:$0xf]
    %v1005 = vld [vmem:[%s10 + $0x14] sm:$0xf]
    %v1006 = vld [vmem:[%s10 + $0x18] sm:$0xf]
    %v1007 = vld [vmem:[%s10 + $0x1c] sm:$0xf]
    %v1008 = vld [vmem:[%s10 + $0x20] sm:$0xf]
    %v1009 = vld [vmem:[%s10 + $0x24] sm:$0xf]
    %v1010 = vld [vmem:[%s10 + $0x28] sm:$0xf]
    %v1011 = vld [vmem:[%s10 + $0x2c] sm:$0xf]
    %v1012 = vld [vmem:[%s10 + $0x30] sm:$0xf]
    %v1013 = vld [vmem:[%s10 + $0x34] sm:$0xf]
    %v1014 = vld [vmem:[%s10 + $0x38] sm:$0xf]
    %v1015 = vld [vmem:[%s10 + $0x3c] sm:$0xf]
    %v1016 = vld [vmem:[%s10 + $0x40] sm:$0xf]
    %v1017 = vpack.c.bf16 %v996, %v996
    %v1018 = vpack.c.bf16 %v997, %v997
    %v1019 = vld [vmem:[%s11] sm:$0xf]
    %v1020 = vld [vmem:[%s11 + $0x4] sm:$0xf]
    %v1021 = vld [vmem:[%s11 + $0x8] sm:$0xf]
    %v1022 = vld [vmem:[%s11 + $0xc] sm:$0xf]
    %v1023 = vld [vmem:[%s11 + $0x10] sm:$0xf]
    %v1024 = vld [vmem:[%s11 + $0x14] sm:$0xf]
    %v1025 = vld [vmem:[%s11 + $0x18] sm:$0xf]
    %v1026 = vld [vmem:[%s11 + $0x1c] sm:$0xf]
    %v1027 = vld [vmem:[%s11 + $0x20] sm:$0xf]
    %v1028 = vld [vmem:[%s11 + $0x24] sm:$0xf]
    %v1029 = vld [vmem:[%s11 + $0x28] sm:$0xf]
    %v1030 = vld [vmem:[%s11 + $0x2c] sm:$0xf]
    %v1031 = vld [vmem:[%s11 + $0x30] sm:$0xf]
    %v1032 = vld [vmem:[%s11 + $0x34] sm:$0xf]
    %v1033 = vld [vmem:[%s11 + $0x38] sm:$0xf]
    %v1034 = vld [vmem:[%s11 + $0x3c] sm:$0xf]
    %v1035 = vld [vmem:[%s11 + $0x40] sm:$0xf]
    %v1053 = vunpack.c.l.b16 %v1019
    %v1054 = vunpack.c.l.b16 %v1020
    %v1055 = vunpack.c.l.b16 %v1021
    %v1056 = vunpack.c.l.b16 %v1022
    %v1057 = vunpack.c.l.b16 %v1023
    %v1058 = vunpack.c.l.b16 %v1024
    %v1059 = vunpack.c.l.b16 %v1025
    %v1060 = vunpack.c.l.b16 %v1026
    %v1061 = vunpack.c.l.b16 %v1027
    %v1062 = vunpack.c.l.b16 %v1028
    %v1063 = vunpack.c.l.b16 %v1029
    %v1064 = vunpack.c.l.b16 %v1030
    %v1065 = vunpack.c.l.b16 %v1031
    %v1066 = vunpack.c.l.b16 %v1032
    %v1067 = vunpack.c.l.b16 %v1033
    %v1068 = vunpack.c.l.b16 %v1034
    %v1069 = vunpack.c.l.b16 %v1035
    %v1070 = vpack.c.b16 %v1054, %v1053
    %v1071 = vpack.c.b16 %v1056, %v1055
    %v1072 = vpack.c.b16 %v1058, %v1057
    %v1073 = vpack.c.b16 %v1060, %v1059
    %v1074 = vpack.c.b16 %v1062, %v1061
    %v1075 = vpack.c.b16 %v1064, %v1063
    %v1076 = vpack.c.b16 %v1066, %v1065
    %v1077 = vpack.c.b16 %v1068, %v1067
    %v1078 = vpack.c.b16 %v1069, %v1069
    %v1088 = vsel %vm591, %v1018, 0
    %v1091 = vsel %vm595, %v1078, 0
    %1093 = vmatpush.bf16.msra.mxu0 %v1077
    %1094 = vmatpush.bf16.msra.mxu0 %v1076
    %1095 = vmatpush.bf16.msra.mxu0 %v1075
    %1096 = vmatpush.bf16.msra.mxu0 %v1074
    %1097 = vmatpush.bf16.msra.mxu0 %v1073
    %1098 = vmatpush.bf16.msra.mxu0 %v1072
    %1099 = vmatpush.bf16.msra.mxu0 %v1071
    %1100 = vmatpush.bf16.msra.mxu0 %v1070
    %1101 = vmatmul.bf16.gmra.mxu0 %v1017
    %v1102 = vpop.f32.mrf.mxu0
    %v1103 = vadd.f32 0.0, %v1102
    %v1104 = vpop.f32.mrf.mxu0
    %1105 = vdwg.mxu0
    %1106 = vmatpush.bf16.msra.mxu0 0
    %1107 = vmatpush.bf16.msra.mxu0 0
    %1108 = vmatpush.bf16.msra.mxu0 0
    %1109 = vmatpush.bf16.msra.mxu0 0
    %1110 = vmatpush.bf16.msra.mxu0 0
    %1111 = vmatpush.bf16.msra.mxu0 0
    %1112 = vmatpush.bf16.msra.mxu0 0
    %1113 = vmatpush.bf16.msra.mxu0 %v1091
    %1114 = vmatmul.bf16.gmra.mxu0 %v1088
    %v1115 = vpop.f32.mrf.mxu0
    %v1116 = vadd.f32 %v1103, %v1115
    %v1117 = vpop.f32.mrf.mxu0
    %1118 = vdwg.mxu0
    %v1136 = vunpack.c.l.b16 %v1000
    %v1137 = vunpack.c.l.b16 %v1001
    %v1138 = vunpack.c.l.b16 %v1002
    %v1139 = vunpack.c.l.b16 %v1003
    %v1140 = vunpack.c.l.b16 %v1004
    %v1141 = vunpack.c.l.b16 %v1005
    %v1142 = vunpack.c.l.b16 %v1006
    %v1143 = vunpack.c.l.b16 %v1007
    %v1144 = vunpack.c.l.b16 %v1008
    %v1145 = vunpack.c.l.b16 %v1009
    %v1146 = vunpack.c.l.b16 %v1010
    %v1147 = vunpack.c.l.b16 %v1011
    %v1148 = vunpack.c.l.b16 %v1012
    %v1149 = vunpack.c.l.b16 %v1013
    %v1150 = vunpack.c.l.b16 %v1014
    %v1151 = vunpack.c.l.b16 %v1015
    %v1152 = vunpack.c.l.b16 %v1016
    %v1153 = vpack.c.b16 %v1137, %v1136
    %v1154 = vpack.c.b16 %v1139, %v1138
    %v1155 = vpack.c.b16 %v1141, %v1140
    %v1156 = vpack.c.b16 %v1143, %v1142
    %v1157 = vpack.c.b16 %v1145, %v1144
    %v1158 = vpack.c.b16 %v1147, %v1146
    %v1159 = vpack.c.b16 %v1149, %v1148
    %v1160 = vpack.c.b16 %v1151, %v1150
    %v1161 = vpack.c.b16 %v1152, %v1152
    %v1171 = vsel %vm591, %v999, 0
    %v1174 = vsel %vm595, %v1161, 0
    %1176 = vmatpush.bf16.msra.mxu0 %v1160
    %1177 = vmatpush.bf16.msra.mxu0 %v1159
    %1178 = vmatpush.bf16.msra.mxu0 %v1158
    %1179 = vmatpush.bf16.msra.mxu0 %v1157
    %1180 = vmatpush.bf16.msra.mxu0 %v1156
    %1181 = vmatpush.bf16.msra.mxu0 %v1155
    %1182 = vmatpush.bf16.msra.mxu0 %v1154
    %1183 = vmatpush.bf16.msra.mxu0 %v1153
    %1184 = vmatmul.bf16.gmra.mxu0 %v998
    %v1185 = vpop.f32.mrf.mxu0
    %v1186 = vadd.f32 %v1116, %v1185
    %v1187 = vpop.f32.mrf.mxu0
    %1188 = vdwg.mxu0
    %1189 = vmatpush.bf16.msra.mxu0 0
    %1190 = vmatpush.bf16.msra.mxu0 0
    %1191 = vmatpush.bf16.msra.mxu0 0
    %1192 = vmatpush.bf16.msra.mxu0 0
    %1193 = vmatpush.bf16.msra.mxu0 0
    %1194 = vmatpush.bf16.msra.mxu0 0
    %1195 = vmatpush.bf16.msra.mxu0 0
    %1196 = vmatpush.bf16.msra.mxu0 %v1174
    %1197 = vmatmul.bf16.gmra.mxu0 %v1171
    %v1198 = vpop.f32.mrf.mxu0
    %v1199 = vadd.f32 %v1186, %v1198
    %v1200 = vpop.f32.mrf.mxu0
    %1201 = vdwg.mxu0
    %v1202 = vld [vmem:[%s12] sm:$0x1]
    %v1204 = vperm.slane %v1202, 0
    %v1206 = vadd.f32 %v1199, %v1204
    %vm1207 = vcmask 17408
    %v1208 = vsel %vm1207, %v1206, -inf
    %1209 = vmax.xlane.f32.xlu0 %v1208
    %v1210 = vpop.xlane.xlu0 %1209
    %v1211 = vsub.f32 %v1206, %v1210
    %v1212 = vmul.f32 %v1211, 1.442695
    %v1213 = vpow.pop %v1212
    %v1214 = vsel %vm1207, %v1213, 0.0
    %1215 = vadd.xlane.f32.xlu0 %v1214
    %v1216 = vpop.xlane.xlu0 %1215
    %v1217 = vrcp.pop %v1216
    %v1218 = vmul.f32 %v1213, %v1217
    %1219 = vst.msk [vmem:[#allocation2] sm:$0x3] %vm1207, %v1218
    // Predicated region
    $region54: #{tpu_custom_call.1} parent=1 // pred_check
      _
    $region55: #{tpu_custom_call.1} parent=1 // pred_check_branch
      %1221 = sbr.rel (0) target = $region57
    $region56: #{tpu_custom_call.1} parent=1 // pred_region
      %1223 = vsyncadd [#allocation3], 0
      %s1225 = sshll.u32 [#allocation2], 4
      %s1226 = int_to_ptr.vmem [resolvable:$true] %s1225
      %s1227 = sshll.u32 %s13, 4
      %s1228 = int_to_ptr.hbm [resolvable:$true] %s1227
      %1230 = dma.vmem_to_hbm [thread:$0]  %s1226, 32, %s1228, [#allocation3]
    $region57: #{tpu_custom_call.1} parent=1 // pred_fallthru
      _
    // Predicated region
    $region58: #{tpu_custom_call.1} parent=1 // pred_check
      _
    $region59: #{tpu_custom_call.1} parent=1 // pred_check_branch
      %1232 = sbr.rel (0) target = $region61
    $region60: #{tpu_custom_call.1} parent=1 // pred_region
      %1234 = dma.done [#allocation3], 32
    $region61: #{tpu_custom_call.1} parent=1 // pred_fallthru
      _
    %1235 = vsyncpa [#allocation3], 1

</llo_original>
